<compile_context>
chip_gen: v7x
topology: tpu7x:2x2x1
jax: 0.10.0
libtpu: 0.0.40
codegen_flags: <defaults>
</compile_context>

<pallas_src>
import functools

import jax
import jax.numpy as jnp
from jax.experimental import pallas as pl
from jax.experimental.pallas import tpu as pltpu


def _round_up(x, m):
    return ((x + m - 1) // m) * m


def _linear_bias_kernel(x_ref, w_ref, b_ref, o_ref):
    # x_ref: (tm, K) bf16   w_ref: (K, tn) bf16   b_ref: (1, tn) f32
    # o_ref: (tm, tn) f32.  Epilogue (bias add + cast) stays in the kernel:
    # VALU/vst slots have slack under the MXU.
    acc = jnp.dot(x_ref[...], w_ref[...], preferred_element_type=jnp.float32)
    o_ref[...] = (acc + b_ref[...]).astype(o_ref.dtype)


def linear_pallas(x, w, b, *, tm=512):
    """y = x @ w + b with bf16 operands and f32 accumulation.

    x: (M, K) bf16 activations (M arbitrary; last row tile is masked)
    w: (K, Np) bf16 pre-transposed, pre-padded weights (Np % 128 == 0)
    b: (1, Np) f32 pre-padded bias
    returns: (M, Np) f32
    """
    M, K = x.shape
    Kw, Np = w.shape
    assert Kw == K and Np % 128 == 0

    # Row tile: large enough to cover the x-stream DMA with MXU work in bf16
    # (review: tm=512 on v6e/v7x), but never bigger than the 16-aligned row
    # count, so tiny inputs get a single small block.
    tm = max(16, min(tm, _round_up(M, 16)))
    tm = _round_up(tm, 16)

    # Column tile: whole Np when the double-buffered (K, tn) weight block fits
    # ~12 MiB (safe on v7x's 64 MiB VMEM/TC); otherwise the largest multiple
    # of 128 under that budget.  With tn == Np the weight block index is
    # constant across the grid, so it is DMA'd once and stays resident.
    wbytes = jnp.dtype(w.dtype).itemsize
    tn_budget = (12 << 20) // (2 * K * wbytes)
    tn = min(Np, max(128, (tn_budget // 128) * 128))

    # Grid: (N tiles, M tiles) with M innermost -> weight resident across the
    # whole inner loop; both axes parallel for megacore / v7x core split.
    grid = (pl.cdiv(Np, tn), pl.cdiv(M, tm))

    xbytes = jnp.dtype(x.dtype).itemsize
    bbytes = jnp.dtype(b.dtype).itemsize
    obytes = jnp.dtype(jnp.float32).itemsize

    # Computed VMEM limit: double-buffered actual blocks + headroom.
    vmem_bytes = 2 * (tm * K * xbytes + K * tn * wbytes
                      + 8 * tn * bbytes + tm * tn * obytes)
    vmem_limit = int(1.5 * vmem_bytes) + (2 << 20)
    vmem_limit = max(4 << 20, min(vmem_limit, 56 << 20))

    cost = pl.CostEstimate(
        flops=2 * M * K * Np,
        transcendentals=0,
        bytes_accessed=(M * K * xbytes + K * Np * wbytes
                        + Np * bbytes + M * Np * obytes),
    )

    return pl.pallas_call(
        _linear_bias_kernel,
        out_shape=jax.ShapeDtypeStruct((M, Np), jnp.float32),
        grid_spec=pltpu.PrefetchScalarGridSpec(
            num_scalar_prefetch=0,
            grid=grid,
            in_specs=[
                pl.BlockSpec((tm, K), lambda j, i: (i, 0)),
                pl.BlockSpec((K, tn), lambda j, i: (0, j)),
                pl.BlockSpec((1, tn), lambda j, i: (0, j)),
            ],
            out_specs=pl.BlockSpec((tm, tn), lambda j, i: (i, j)),
        ),
        compiler_params=pltpu.CompilerParams(
            dimension_semantics=("parallel", "parallel"),
            vmem_limit_bytes=vmem_limit,
        ),
        cost_estimate=cost,
    )(x, w, b)


@functools.partial(jax.jit, static_argnames=("out_dim",))
def _cross_modal_forward(vit_patches, cnn_patches,
                         vit_w, vit_b, cnn_w, cnn_b, *, out_dim):
    def proj(x, w, b):
        lead = x.shape[:-1]
        k = x.shape[-1]
        x2 = x.reshape(-1, k).astype(jnp.bfloat16)   # bf16 operands, f32 acc
        y = linear_pallas(x2, w, b)                  # (M, Np) f32
        return y[:, :out_dim].reshape(*lead, out_dim)

    # Two direct calls on the original arrays (no (2, M, K) stack copy).
    return proj(vit_patches, vit_w, vit_b), proj(cnn_patches, cnn_w, cnn_b)


class CrossModalEmbeddingAlignment:
    """JAX/Pallas port of the PyTorch module (deterministic synthetic init)."""

    def __init__(self, common_dim, img_dim=1408, txt_dim=768, query_dim=768,
                 key=None):
        if key is None:
            key = jax.random.PRNGKey(0)
        ks = jax.random.split(key, 8)
        np_ = _round_up(common_dim, 128)   # lane-dense output width

        def init_linear(kw, kb, in_dim):
            # torch.nn.Linear-style Uniform(-1/sqrt(in_dim), 1/sqrt(in_dim)).
            # Stored pre-transposed (K, Np), zero-padded to Np once, weights
            # cast to bf16 once; bias kept f32 (added after f32 accumulation).
            bound = float(in_dim) ** -0.5
            w = jax.random.uniform(kw, (in_dim, common_dim), jnp.float32,
                                   minval=-bound, maxval=bound)
            b = jax.random.uniform(kb, (common_dim,), jnp.float32,
                                   minval=-bound, maxval=bound)
            w = jnp.pad(w, ((0, 0), (0, np_ - common_dim))).astype(jnp.bfloat16)
            b = jnp.pad(b, (0, np_ - common_dim)).reshape(1, np_)
            return w, b

        self.vit_w, self.vit_b = init_linear(ks[0], ks[1], img_dim)
        self.cnn_w, self.cnn_b = init_linear(ks[2], ks[3], img_dim)
        # txt / query params exist for parity with the PyTorch module, but
        # their projections are never returned by forward -> never traced.
        self.txt_w, self.txt_b = init_linear(ks[4], ks[5], txt_dim)
        self.qry_w, self.qry_b = init_linear(ks[6], ks[7], query_dim)
        self.common_dim = common_dim

    def __call__(self, vit_patches, cnn_patches,
                 text_embeddings=None, query_embeddings=None):
        # TODO(synk): txt/query projections are dead code in the reference
        # forward (computed but discarded); intentionally not traced here.
        return _cross_modal_forward(
            vit_patches, cnn_patches,
            self.vit_w, self.vit_b, self.cnn_w, self.cnn_b,
            out_dim=self.common_dim)


if __name__ == "__main__":
    # Small shapes consistent with the module's interface.  S=9 and
    # COMMON_DIM=96 exercise the partial row tile (18 rows) and the lane pad
    # (96 -> 128) handled at init.
    B, S = 2, 9
    IMG_DIM = 128        # stands in for 1408
    TXT_DIM = 64         # stands in for 768
    QRY_DIM = 64         # stands in for 768
    COMMON_DIM = 96

    key = jax.random.PRNGKey(0)
    k_vit, k_cnn, k_txt, k_qry, k_params = jax.random.split(key, 5)

    vit_patches = jax.random.normal(k_vit, (B, S, IMG_DIM), jnp.float32)
    cnn_patches = jax.random.normal(k_cnn, (B, S, IMG_DIM), jnp.float32)
    text_embeddings = jax.random.normal(k_txt, (B, S, TXT_DIM), jnp.float32)
    query_embeddings = jax.random.normal(k_qry, (B, S, QRY_DIM), jnp.float32)

    model = CrossModalEmbeddingAlignment(
        COMMON_DIM, img_dim=IMG_DIM, txt_dim=TXT_DIM, query_dim=QRY_DIM,
        key=k_params)

    vit_proj, cnn_proj = model(vit_patches, cnn_patches,
                               text_embeddings, query_embeddings)
    jax.block_until_ready((vit_proj, cnn_proj))

    # Reference with the same bf16 operands / f32 accumulation as the kernel.
    def ref(x, w, b):
        y = jnp.dot(x.astype(jnp.bfloat16), w,
                    preferred_element_type=jnp.float32) + b
        return y[..., :COMMON_DIM]

    vit_ref = ref(vit_patches, model.vit_w, model.vit_b)
    cnn_ref = ref(cnn_patches, model.cnn_w, model.cnn_b)

    assert vit_proj.shape == (B, S, COMMON_DIM)
    assert cnn_proj.shape == (B, S, COMMON_DIM)
    assert jnp.allclose(vit_proj, vit_ref, atol=1e-3, rtol=1e-3)
    assert jnp.allclose(cnn_proj, cnn_ref, atol=1e-3, rtol=1e-3)

    print("KERNEL_OK")
</pallas_src>

<mosaic_0001>
module attributes {stable_mosaic.version = 11 : i64} {
  func.func @_linear_bias_kernel(%arg0: i32, %arg1: i32, %arg2: memref<32x128xbf16, #tpu.memory_space<vmem>>, %arg3: memref<128x128xbf16, #tpu.memory_space<vmem>>, %arg4: memref<1x128xf32, #tpu.memory_space<vmem>>, %arg5: memref<32x128xf32, #tpu.memory_space<vmem>>) attributes {dimension_semantics = [#tpu.dimension_semantics<parallel>, #tpu.dimension_semantics<parallel>], iteration_bounds = array<i64: 1, 1>, scalar_prefetch = 0 : i64, scratch_operands = 0 : i64, tpu.core_type = #tpu.core_type<tc>, window_params = [{transform_indices = @transform_0, window_bounds = array<i64: 32, 128>}, {transform_indices = @transform_1, window_bounds = array<i64: 128, 128>}, {transform_indices = @transform_2, window_bounds = array<i64: 1, 128>}, {transform_indices = @transform_3, window_bounds = array<i64: 32, 128>}]} {
    %c0 = arith.constant 0 : index
    %c0_0 = arith.constant 0 : index
    %0 = vector.load %arg2[%c0, %c0_0] : memref<32x128xbf16, #tpu.memory_space<vmem>>, vector<32x128xbf16>
    %c0_1 = arith.constant 0 : index
    %c0_2 = arith.constant 0 : index
    %1 = vector.load %arg3[%c0_1, %c0_2] : memref<128x128xbf16, #tpu.memory_space<vmem>>, vector<128x128xbf16>
    %cst = arith.constant dense<0.000000e+00> : vector<32x128xf32>
    %2 = tpu.matmul %0, %1, %cst {dimension_numbers = #tpu.dot_dimension_numbers<[1], [0], [0], [1], [0, 0, 1, 1], [], []>} : vector<32x128xbf16>, vector<128x128xbf16>, vector<32x128xf32> -> vector<32x128xf32>
    %c0_3 = arith.constant 0 : index
    %c0_4 = arith.constant 0 : index
    %3 = vector.load %arg4[%c0_3, %c0_4] : memref<1x128xf32, #tpu.memory_space<vmem>>, vector<1x128xf32>
    %4 = vector.broadcast %3 : vector<1x128xf32> to vector<32x128xf32>
    %5 = arith.addf %2, %4 : vector<32x128xf32>
    %c0_5 = arith.constant 0 : index
    %c0_6 = arith.constant 0 : index
    %6 = vector.load %arg5[%c0_5, %c0_6] : memref<32x128xf32, #tpu.memory_space<vmem>>, vector<32x128xf32>
    tpu.vector_store %arg5[%c0_5, %c0_6], %5 {strides = array<i32>} : memref<32x128xf32, #tpu.memory_space<vmem>>, vector<32x128xf32>,
    return
  }
  func.func @transform_0(%arg0: i32, %arg1: i32) -> (i32, i32) {
    %c0_i32 = arith.constant 0 : i32
    %c0_i32_0 = arith.constant 0 : i32
    return %arg1, %c0_i32 : i32, i32
  }
  func.func @transform_1(%arg0: i32, %arg1: i32) -> (i32, i32) {
    %c0_i32 = arith.constant 0 : i32
    %c0_i32_0 = arith.constant 0 : i32
    return %c0_i32, %arg0 : i32, i32
  }
  func.func @transform_2(%arg0: i32, %arg1: i32) -> (i32, i32) {
    %c0_i32 = arith.constant 0 : i32
    %c0_i32_0 = arith.constant 0 : i32
    return %c0_i32, %arg0 : i32, i32
  }
  func.func @transform_3(%arg0: i32, %arg1: i32) -> (i32, i32) {
    %c0_i32 = arith.constant 0 : i32
    return %arg1, %arg0 : i32, i32
  }
}

</mosaic_0001>

<llo_original>
// kernel: _cross_modal_forward.3
$region0: #{_cross_modal_forward.3}
  #allocation0 [shape = 'u32[]', space=smem, size = 0x4, offset = 0x4, fixed_abs, tag = 'smem constant byte address 0x4 - core index']
  #allocation1 [shape = 'u32[144,128]{1,0:T(1,128)}', space=vmem, size = 0x12000, scoped, tag = 'internal scratch']
  %s0 = inlined_call_operand.vmem [shape: bf16[18,128], index: 0, kind: input, shape index: {}]
  %s1 = inlined_call_operand.vmem [shape: bf16[128,128], index: 1, kind: input, shape index: {}]
  %s2 = inlined_call_operand.vmem [shape: f32[1,128], index: 2, kind: input, shape index: {}]
  %s3 = inlined_call_operand.vmem [shape: f32[18,128], index: 3, kind: output, shape index: {}]
  %s4 = sld [smem:[#allocation0]]
  $region56: #{_cross_modal_forward.3} parent=0
    _
  %s6 = ssub.s32 1, %s4
  %s7 = scalar_select 0, %s6, %s4
  $region1: #{_cross_modal_forward.3} parent=0
    #allocation2 [shape = 'u8[16384]{0}', space=vmem, size = 0x4000, scoped, tag = 'output window, operand 0, single buffered']
    // Predicated region
    $region2: #{_cross_modal_forward.3} parent=1 // pred_check
      _
    $region3: #{_cross_modal_forward.3} parent=1 // pred_check_branch
      %9 = sbr.rel (0) target = $region5
    $region4: #{_cross_modal_forward.3} parent=1 // pred_region
      _
    $region5: #{_cross_modal_forward.3} parent=1 // pred_fallthru
      _
    // Predicated region
    $region6: #{_cross_modal_forward.3} parent=1 // pred_check
      _
    $region7: #{_cross_modal_forward.3} parent=1 // pred_check_branch
      %11 = sbr.rel (0) target = $region9
    $region8: #{_cross_modal_forward.3} parent=1 // pred_region
      _
    $region9: #{_cross_modal_forward.3} parent=1 // pred_fallthru
      _
    // Predicated region
    $region10: #{_cross_modal_forward.3} parent=1 // pred_check
      _
    $region11: #{_cross_modal_forward.3} parent=1 // pred_check_branch
      %13 = sbr.rel (0) target = $region13
    $region12: #{_cross_modal_forward.3} parent=1 // pred_region
      _
    $region13: #{_cross_modal_forward.3} parent=1 // pred_fallthru
      _
    %v15 = vld [vmem:[%s0] sm:$0xf]
    %v16 = vld [vmem:[%s0 + $0x4] sm:$0xf]
    %v17 = vld [vmem:[%s0 + $0x8] sm:$0xf]
    %v18 = vld [vmem:[%s0 + $0xc] sm:$0xf]
    %v19 = vld [vmem:[%s1] sm:$0xf]
    %v20 = vld [vmem:[%s1 + $0x4] sm:$0xf]
    %v21 = vld [vmem:[%s1 + $0x8] sm:$0xf]
    %v22 = vld [vmem:[%s1 + $0xc] sm:$0xf]
    %v23 = vld [vmem:[%s1 + $0x10] sm:$0xf]
    %v24 = vld [vmem:[%s1 + $0x14] sm:$0xf]
    %v25 = vld [vmem:[%s1 + $0x18] sm:$0xf]
    %v26 = vld [vmem:[%s1 + $0x1c] sm:$0xf]
    %v27 = vld [vmem:[%s1 + $0x20] sm:$0xf]
    %v28 = vld [vmem:[%s1 + $0x24] sm:$0xf]
    %v29 = vld [vmem:[%s1 + $0x28] sm:$0xf]
    %v30 = vld [vmem:[%s1 + $0x2c] sm:$0xf]
    %v31 = vld [vmem:[%s1 + $0x30] sm:$0xf]
    %v32 = vld [vmem:[%s1 + $0x34] sm:$0xf]
    %v33 = vld [vmem:[%s1 + $0x38] sm:$0xf]
    %v34 = vld [vmem:[%s1 + $0x3c] sm:$0xf]
    %v35 = vld [vmem:[%s2] sm:$0x1]
    %v37 = vlaneseq
    %v38 = vshrl.u32 %v37, 7
    %v39 = vsub.s32 0, %v38
    %v40 = vrot.slane %v35, %v39
    %v46 = vunpack.c.l.b16 %v15
    %v47 = vunpack.c.l.b16 %v16
    %v48 = vunpack.c.l.b16 %v17
    %v49 = vunpack.c.l.b16 %v18
    %v50 = vpack.c.b16 %v47, %v46
    %v51 = vpack.c.b16 %v49, %v48
    %v70 = vunpack.c.l.b16 %v19
    %v71 = vunpack.c.l.b16 %v20
    %v72 = vunpack.c.l.b16 %v21
    %v73 = vunpack.c.l.b16 %v22
    %v74 = vunpack.c.l.b16 %v23
    %v75 = vunpack.c.l.b16 %v24
    %v76 = vunpack.c.l.b16 %v25
    %v77 = vunpack.c.l.b16 %v26
    %v78 = vunpack.c.l.b16 %v27
    %v79 = vunpack.c.l.b16 %v28
    %v80 = vunpack.c.l.b16 %v29
    %v81 = vunpack.c.l.b16 %v30
    %v82 = vunpack.c.l.b16 %v31
    %v83 = vunpack.c.l.b16 %v32
    %v84 = vunpack.c.l.b16 %v33
    %v85 = vunpack.c.l.b16 %v34
    %v86 = vpack.c.b16 %v71, %v70
    %v87 = vpack.c.b16 %v73, %v72
    %v88 = vpack.c.b16 %v75, %v74
    %v89 = vpack.c.b16 %v77, %v76
    %v90 = vpack.c.b16 %v79, %v78
    %v91 = vpack.c.b16 %v81, %v80
    %v92 = vpack.c.b16 %v83, %v82
    %v93 = vpack.c.b16 %v85, %v84
    %102 = vmatprep.subr.bf16.mxu0 0
    %103 = vmatpush1.bf16.msra.mxu0 %v86
    %104 = vmatprep.subr.bf16.mxu0 0
    %105 = vmatpush1.bf16.msra.mxu0 %v87
    %106 = vmatprep.subr.bf16.mxu0 0
    %107 = vmatpush1.bf16.msra.mxu0 %v88
    %108 = vmatprep.subr.bf16.mxu0 0
    %109 = vmatpush1.bf16.msra.mxu0 %v89
    %110 = vmatprep.subr.bf16.mxu0 0
    %111 = vmatpush1.bf16.msra.mxu0 %v90
    %112 = vmatprep.subr.bf16.mxu0 0
    %113 = vmatpush1.bf16.msra.mxu0 %v91
    %114 = vmatprep.subr.bf16.mxu0 0
    %115 = vmatpush1.bf16.msra.mxu0 %v92
    %116 = vmatprep.subr.bf16.mxu0 0
    %117 = vmatpush1.bf16.msra.mxu0 %v93
    %118 = vmatprep.subr.bf16.mxu0 0
    %119 = vmatpush1.bf16.msra.mxu0 0
    %120 = vmatprep.subr.bf16.mxu0 0
    %121 = vmatpush1.bf16.msra.mxu0 0
    %122 = vmatprep.subr.bf16.mxu0 0
    %123 = vmatpush1.bf16.msra.mxu0 0
    %124 = vmatprep.subr.bf16.mxu0 0
    %125 = vmatpush1.bf16.msra.mxu0 0
    %126 = vmatprep.subr.bf16.mxu0 0
    %127 = vmatpush1.bf16.msra.mxu0 0
    %128 = vmatprep.subr.bf16.mxu0 0
    %129 = vmatpush1.bf16.msra.mxu0 0
    %130 = vmatprep.subr.bf16.mxu0 0
    %131 = vmatpush1.bf16.msra.mxu0 0
    %132 = vmatprep.subr.bf16.mxu0 0
    %133 = vmatpush1.bf16.msra.mxu0 0
    %134 = vmatprep.mubr.bf16.mxu0 0
    %135 = vmatmul.mubr.bf16.gmra.mrb[0].mxu0 %v50
    %v136 = vpop.f32.mrb[0].mxu0
    %v137 = vadd.f32 %v40, %v136
    %v138 = vpop.f32.mrb[0].mxu0
    %v139 = vpop.f32.mrb[0].mxu0
    %v140 = vadd.f32 %v40, %v139
    %v141 = vpop.f32.mrb[0].mxu0
    %142 = vmatprep.mubr.bf16.mxu0 0
    %143 = vmatmul.mubr.bf16.gmra.mrb[0].mxu0 %v51
    %v144 = vpop.f32.mrb[0].mxu0
    %v145 = vadd.f32 %v40, %v144
    %v146 = vpop.f32.mrb[0].mxu0
    %v147 = vpop.f32.mrb[0].mxu0
    %v148 = vadd.f32 %v40, %v147
    %v149 = vpop.f32.mrb[0].mxu0
    %150 = vdwg.mxu0
    %151 = vst [vmem:[#allocation2] sm:$0xff] %v137
    %152 = vst [vmem:[#allocation2 + $0x8] sm:$0xff] %v140
    %153 = vst [vmem:[#allocation2 + $0x10] sm:$0xff] %v145
    %154 = vst [vmem:[#allocation2 + $0x18] sm:$0xff] %v148
    // Predicated region
    $region14: #{_cross_modal_forward.3} parent=1 // pred_check
      _
    $region15: #{_cross_modal_forward.3} parent=1 // pred_check_branch
      %156 = sbr.rel (0) target = $region17
    $region16: #{_cross_modal_forward.3} parent=1 // pred_region
      // Predicated region
      $region18: #{_cross_modal_forward.3} parent=16 // pred_check
        _
      $region19: #{_cross_modal_forward.3} parent=16 // pred_check_branch
        %158 = sbr.rel (0) target = $region21
      $region20: #{_cross_modal_forward.3} parent=16 // pred_region
        // Predicated region
        $region22: #{_cross_modal_forward.3} parent=20 // pred_check
          _
        $region23: #{_cross_modal_forward.3} parent=20 // pred_check_branch
          %160 = sbr.rel (0) target = $region25
        $region24: #{_cross_modal_forward.3} parent=20 // pred_region
          // Predicated region
          $region37: #{_cross_modal_forward.3} parent=24 // pred_check
            _
          $region38: #{_cross_modal_forward.3} parent=24 // pred_check_branch
            %179 = sbr.rel (0) target = $region40
          $region39: #{_cross_modal_forward.3} parent=24 // pred_region
            loop: start=0, step=1, limit=1
            $region41: #{_cross_modal_forward.3} parent=39 // loop_pre_header
              _
            $region42: #{_cross_modal_forward.3} parent=39 // loop_header
              %s181 = sphi 0, %s185
              %p182 = scmp.ge.s32.totalorder %s181, 1
              %s186 = sphi [#allocation2], [#allocation2]
              %s187 = sphi %s3, %s3
            $region43: #{_cross_modal_forward.3} parent=39 // loop_header_branch
              %184 = sbr.rel (%p182) target = $region47
            $region44: #{_cross_modal_forward.3} parent=39 // loop_body
              %v188 = vld [vmem:[%s186] sm:$0xff]
              %189 = vst [vmem:[%s187] sm:$0xff] %v188
              %v190 = vld [vmem:[%s186 + $0x8] sm:$0xff]
              %191 = vst [vmem:[%s187 + $0x8] sm:$0xff] %v190
              %v192 = vld [vmem:[%s186 + $0x10] sm:$0xff]
              %193 = vst [vmem:[%s187 + $0x10] sm:$0xff] %v192
            $region45: #{_cross_modal_forward.3} parent=39 // loop_footer
              %s185 = sadd.s32 1, %s181
            $region46: #{_cross_modal_forward.3} parent=39 // loop_footer_branch
              %180 = sbr.rel target = $region42
            $region47: #{_cross_modal_forward.3} parent=39 // loop_exit
              _
          $region40: #{_cross_modal_forward.3} parent=24 // pred_fallthru
            _
          // Predicated region
          $region48: #{_cross_modal_forward.3} parent=24 // pred_check
            _
          $region49: #{_cross_modal_forward.3} parent=24 // pred_check_branch
            %195 = sbr.rel target = $region51
          $region50: #{_cross_modal_forward.3} parent=24 // pred_region
            _
          $region51: #{_cross_modal_forward.3} parent=24 // pred_fallthru
            _
        $region25: #{_cross_modal_forward.3} parent=20 // pred_fallthru
          _
        // Predicated region
        $region26: #{_cross_modal_forward.3} parent=20 // pred_check
          _
        $region27: #{_cross_modal_forward.3} parent=20 // pred_check_branch
          %162 = sbr.rel target = $region29
        $region28: #{_cross_modal_forward.3} parent=20 // pred_region
          loop: start=0, step=1, limit=1
          $region30: #{_cross_modal_forward.3} parent=28 // loop_pre_header
            _
          $region31: #{_cross_modal_forward.3} parent=28 // loop_header
            %s165 = sphi 0, %s169
            %p166 = scmp.ge.s32.totalorder %s165, 1
            %s170 = sphi [#allocation2], [#allocation2]
            %s171 = sphi %s3, %s3
          $region32: #{_cross_modal_forward.3} parent=28 // loop_header_branch
            %168 = sbr.rel (%p166) target = $region36
          $region33: #{_cross_modal_forward.3} parent=28 // loop_body
            %v172 = vld [vmem:[%s170] sm:$0xff]
            %173 = vst [vmem:[%s171] sm:$0xff] %v172
            %v174 = vld [vmem:[%s170 + $0x8] sm:$0xff]
            %175 = vst [vmem:[%s171 + $0x8] sm:$0xff] %v174
            %v176 = vld [vmem:[%s170 + $0x10] sm:$0xff]
            %177 = vst [vmem:[%s171 + $0x10] sm:$0xff] %v176
          $region34: #{_cross_modal_forward.3} parent=28 // loop_footer
            %s169 = sadd.s32 1, %s165
          $region35: #{_cross_modal_forward.3} parent=28 // loop_footer_branch
            %164 = sbr.rel target = $region31
          $region36: #{_cross_modal_forward.3} parent=28 // loop_exit
            _
        $region29: #{_cross_modal_forward.3} parent=20 // pred_fallthru
          _
      $region21: #{_cross_modal_forward.3} parent=16 // pred_fallthru
        _
      %196 = vnop
    $region17: #{_cross_modal_forward.3} parent=1 // pred_fallthru
      _
    // Predicated region
    $region52: #{_cross_modal_forward.3} parent=1 // pred_check
      _
    $region53: #{_cross_modal_forward.3} parent=1 // pred_check_branch
      %198 = sbr.rel (0) target = $region55
    $region54: #{_cross_modal_forward.3} parent=1 // pred_region
      _
    $region55: #{_cross_modal_forward.3} parent=1 // pred_fallthru
      _

</llo_original>
